<compile_context>
chip_gen: v7x
topology: tpu7x:2x2x1
jax: 0.10.0
libtpu: 0.0.40
codegen_flags: <defaults>
</compile_context>

<pallas_src>
import math

import jax
import jax.numpy as jnp
from jax.experimental import pallas as pl
from jax.experimental.pallas import tpu as pltpu


def _sobel_edge_kernel(gray_ref, out_ref):
    """gray_ref: (H+2, Wc) f32, reflect-101-padded gray images concatenated
    along the lane axis (per-image stride blk = Wc // B; valid pixels live in
    within-block columns 1..W).  out_ref: (H, Wc) f32 = edge/255.  The border
    and pad columns of each block contain garbage and are cropped by the
    caller, so lane-roll wrap-around never contaminates valid outputs."""
    h = out_ref.shape[0]
    wc = out_ref.shape[1]

    g = gray_ref[...]                        # (H+2, Wc), integer-valued f32
    top = g[0:h, :]
    mid = g[1:h + 1, :]
    bot = g[2:h + 2, :]

    # Separable Sobel, vertical pass (all images at once, full slab width).
    smooth_v = top + 2.0 * mid + bot         # column kernel [1,2,1]  (grad_x)
    diff_v = bot - top                       # column kernel [-1,0,1] (grad_y)

    # Horizontal pass via lane rotations (XLU slot, co-issues with VPU work).
    s_m1 = pltpu.roll(smooth_v, shift=1, axis=1)        # column j-1
    s_p1 = pltpu.roll(smooth_v, shift=wc - 1, axis=1)   # column j+1 (== shift -1)
    d_m1 = pltpu.roll(diff_v, shift=1, axis=1)
    d_p1 = pltpu.roll(diff_v, shift=wc - 1, axis=1)

    grad_x = s_p1 - s_m1                     # row kernel [-1,0,1]
    grad_y = d_m1 + 2.0 * diff_v + d_p1      # row kernel [1,2,1]
    # (sign of grad_x is irrelevant: convertScaleAbs takes |.| next)

    # cv2.convertScaleAbs: |x|, round, saturate_cast<uint8>
    abs_gx = jnp.clip(jnp.round(jnp.abs(grad_x)), 0.0, 255.0)
    abs_gy = jnp.clip(jnp.round(jnp.abs(grad_y)), 0.0, 255.0)

    # cv2.addWeighted(a, 0.5, b, 0.5, 0) on uint8: round + saturate
    edge_u8 = jnp.clip(jnp.round(0.5 * abs_gx + 0.5 * abs_gy), 0.0, 255.0)

    # ToTensor: uint8 -> float32 / 255   (single lane-dense full-width store)
    out_ref[...] = edge_u8 * (1.0 / 255.0)


def _resize_gray_pad(images_u8, image_size):
    """(B,H0,W0,3) uint8 -> (B,H+2,W+2) f32 reflect-101-padded uint8-valued gray."""
    H, W = image_size
    B = images_u8.shape[0]
    img_f32 = images_u8.astype(jnp.float32)
    # TODO(synk): PIL's antialiased bilinear resize is approximated with
    # jax.image.resize 'bilinear'; exact pixel values may differ slightly.
    resized = jax.image.resize(img_f32, (B, H, W, 3), method="bilinear")
    resized = jnp.clip(jnp.round(resized), 0.0, 255.0)        # np.asarray(PIL) -> uint8
    # RGB->BGR followed by BGR2GRAY == standard luma on the original RGB.
    # TODO(synk): cv2 uses fixed-point luma coefficients; +/-1 LSB possible.
    gray = jnp.round(0.299 * resized[..., 0] + 0.587 * resized[..., 1]
                     + 0.114 * resized[..., 2])               # (B, H, W)
    return jnp.pad(gray, ((0, 0), (1, 1), (1, 1)), mode="reflect")


def image_test_transform(images_u8, image_size=(16, 16)):
    """images_u8: (B, H0, W0, 3) or (H0, W0, 3) uint8 RGB ->
       (B, 3, H, W) or (3, H, W) float32 Sobel-edge tensor in [0, 1]."""
    squeeze = images_u8.ndim == 3
    if squeeze:
        images_u8 = images_u8[None]
    B = images_u8.shape[0]
    H, W = image_size

    gpad = _resize_gray_pad(images_u8, image_size)            # (B, H+2, W+2)

    # Per-image lane stride: smallest blk >= W+2 such that B*blk is a multiple
    # of 128 -> lane-dense, tile-aligned slab for the kernel (and for roll).
    step = 128 // math.gcd(B, 128)
    blk = ((W + 2 + step - 1) // step) * step
    gpad = jnp.pad(gpad, ((0, 0), (0, 0), (0, blk - (W + 2))))  # (B, H+2, blk)
    slab = jnp.transpose(gpad, (1, 0, 2)).reshape(H + 2, B * blk)

    # TODO(synk): for large image_size, add a row grid with a 2-row halo,
    # dimension_semantics=("parallel",) (v7x megacore) and an explicit
    # vmem_limit_bytes instead of mapping the whole slab into VMEM.
    edge_slab = pl.pallas_call(
        _sobel_edge_kernel,
        out_shape=jax.ShapeDtypeStruct((H, B * blk), jnp.float32),
        in_specs=[pl.BlockSpec(memory_space=pltpu.MemorySpace.VMEM)],
        out_specs=pl.BlockSpec(memory_space=pltpu.MemorySpace.VMEM),
    )(slab)

    # Crop the valid interior W columns of each per-image block.
    edge = edge_slab.reshape(H, B, blk)[:, :, 1:1 + W]        # (H, B, W)
    edge = jnp.transpose(edge, (1, 0, 2))                     # (B, H, W)

    # torch.cat((image, image, image), 0): broadcast, no materialized copies.
    out = jnp.broadcast_to(edge[:, None, :, :], (B, 3, H, W))
    return out[0] if squeeze else out


def _reference_edges(gpad):
    """Pure-JAX reference of the in-kernel math (direct 9-window Sobel)."""
    _, Hp2, Wp2 = gpad.shape
    H, W = Hp2 - 2, Wp2 - 2

    def win(dy, dx):
        return gpad[:, dy:dy + H, dx:dx + W]

    gx = (-win(0, 0) + win(0, 2) - 2.0 * win(1, 0) + 2.0 * win(1, 2)
          - win(2, 0) + win(2, 2))
    gy = (-win(0, 0) - 2.0 * win(0, 1) - win(0, 2)
          + win(2, 0) + 2.0 * win(2, 1) + win(2, 2))
    ax = jnp.clip(jnp.round(jnp.abs(gx)), 0.0, 255.0)
    ay = jnp.clip(jnp.round(jnp.abs(gy)), 0.0, 255.0)
    return jnp.clip(jnp.round(0.5 * ax + 0.5 * ay), 0.0, 255.0) / 255.0


if __name__ == "__main__":
    key = jax.random.PRNGKey(0)
    B, H0, W0 = 8, 20, 24          # batch of small synthetic "PIL images"
    image_size = (16, 16)

    images = jax.random.randint(key, (B, H0, W0, 3), 0, 256, dtype=jnp.int32)
    images = images.astype(jnp.uint8)

    fwd = jax.jit(lambda x: image_test_transform(x, image_size=image_size))
    out = jax.block_until_ready(fwd(images))

    assert out.shape == (B, 3, *image_size), out.shape
    assert out.dtype == jnp.float32, out.dtype
    assert bool(jnp.all(out >= 0.0)) and bool(jnp.all(out <= 1.0))

    # Numerical check of the kernel path against a plain-JAX reference.
    ref = _reference_edges(_resize_gray_pad(images, image_size))   # (B, H, W)
    assert bool(jnp.allclose(out[:, 0], ref, atol=1e-6)), "mismatch vs reference"
    assert bool(jnp.allclose(out[:, 0], out[:, 1]))
    assert bool(jnp.allclose(out[:, 0], out[:, 2]))

    print("KERNEL_OK")
</pallas_src>

<mosaic_0001>
module attributes {stable_mosaic.version = 11 : i64} {
  func.func @_sobel_edge_kernel(%arg0: memref<18x256xf32, #tpu.memory_space<vmem>>, %arg1: memref<16x256xf32, #tpu.memory_space<vmem>>) attributes {dimension_semantics = [], scalar_prefetch = 0 : i64, scratch_operands = 0 : i64, tpu.core_type = #tpu.core_type<tc>} {
    %c0 = arith.constant 0 : index
    %c0_0 = arith.constant 0 : index
    %0 = vector.load %arg0[%c0, %c0_0] : memref<18x256xf32, #tpu.memory_space<vmem>>, vector<18x256xf32>
    %1 = vector.extract_strided_slice %0 {offsets = [0, 0], sizes = [16, 256], strides = [1, 1]} : vector<18x256xf32> to vector<16x256xf32>
    %2 = vector.extract_strided_slice %0 {offsets = [1, 0], sizes = [16, 256], strides = [1, 1]} : vector<18x256xf32> to vector<16x256xf32>
    %3 = vector.extract_strided_slice %0 {offsets = [2, 0], sizes = [16, 256], strides = [1, 1]} : vector<18x256xf32> to vector<16x256xf32>
    %cst = arith.constant 2.000000e+00 : f32
    %4 = vector.broadcast %cst : f32 to vector<16x256xf32>
    %5 = arith.mulf %4, %2 : vector<16x256xf32>
    %6 = arith.addf %1, %5 : vector<16x256xf32>
    %7 = arith.addf %6, %3 : vector<16x256xf32>
    %8 = arith.subf %3, %1 : vector<16x256xf32>
    %c1_i32 = arith.constant 1 : i32
    %9 = tpu.dynamic_rotate %7 by %c1_i32 dim 1 : vector<16x256xf32>, i32 -> vector<16x256xf32>
    %c255_i32 = arith.constant 255 : i32
    %10 = tpu.dynamic_rotate %7 by %c255_i32 dim 1 : vector<16x256xf32>, i32 -> vector<16x256xf32>
    %c1_i32_1 = arith.constant 1 : i32
    %11 = tpu.dynamic_rotate %8 by %c1_i32_1 dim 1 : vector<16x256xf32>, i32 -> vector<16x256xf32>
    %c255_i32_2 = arith.constant 255 : i32
    %12 = tpu.dynamic_rotate %8 by %c255_i32_2 dim 1 : vector<16x256xf32>, i32 -> vector<16x256xf32>
    %13 = arith.subf %10, %9 : vector<16x256xf32>
    %cst_3 = arith.constant 2.000000e+00 : f32
    %14 = vector.broadcast %cst_3 : f32 to vector<16x256xf32>
    %15 = arith.mulf %14, %8 : vector<16x256xf32>
    %16 = arith.addf %11, %15 : vector<16x256xf32>
    %17 = arith.addf %16, %12 : vector<16x256xf32>
    %18 = math.absf %13 : vector<16x256xf32>
    %19 = math.roundeven %18 : vector<16x256xf32>
    %cst_4 = arith.constant 0.000000e+00 : f32
    %cst_5 = arith.constant 2.550000e+02 : f32
    %20 = vector.broadcast %cst_4 : f32 to vector<16x256xf32>
    %21 = arith.maximumf %20, %19 : vector<16x256xf32>
    %22 = vector.broadcast %cst_5 : f32 to vector<16x256xf32>
    %23 = arith.minimumf %22, %21 : vector<16x256xf32>
    %24 = math.absf %17 : vector<16x256xf32>
    %25 = math.roundeven %24 : vector<16x256xf32>
    %cst_6 = arith.constant 0.000000e+00 : f32
    %cst_7 = arith.constant 2.550000e+02 : f32
    %26 = vector.broadcast %cst_6 : f32 to vector<16x256xf32>
    %27 = arith.maximumf %26, %25 : vector<16x256xf32>
    %28 = vector.broadcast %cst_7 : f32 to vector<16x256xf32>
    %29 = arith.minimumf %28, %27 : vector<16x256xf32>
    %cst_8 = arith.constant 5.000000e-01 : f32
    %30 = vector.broadcast %cst_8 : f32 to vector<16x256xf32>
    %31 = arith.mulf %30, %23 : vector<16x256xf32>
    %cst_9 = arith.constant 5.000000e-01 : f32
    %32 = vector.broadcast %cst_9 : f32 to vector<16x256xf32>
    %33 = arith.mulf %32, %29 : vector<16x256xf32>
    %34 = arith.addf %31, %33 : vector<16x256xf32>
    %35 = math.roundeven %34 : vector<16x256xf32>
    %cst_10 = arith.constant 0.000000e+00 : f32
    %cst_11 = arith.constant 2.550000e+02 : f32
    %36 = vector.broadcast %cst_10 : f32 to vector<16x256xf32>
    %37 = arith.maximumf %36, %35 : vector<16x256xf32>
    %38 = vector.broadcast %cst_11 : f32 to vector<16x256xf32>
    %39 = arith.minimumf %38, %37 : vector<16x256xf32>
    %cst_12 = arith.constant 0.00392156886 : f32
    %40 = vector.broadcast %cst_12 : f32 to vector<16x256xf32>
    %41 = arith.mulf %39, %40 : vector<16x256xf32>
    %c0_13 = arith.constant 0 : index
    %c0_14 = arith.constant 0 : index
    %42 = vector.load %arg1[%c0_13, %c0_14] : memref<16x256xf32, #tpu.memory_space<vmem>>, vector<16x256xf32>
    tpu.vector_store %arg1[%c0_13, %c0_14], %41 {strides = array<i32>} : memref<16x256xf32, #tpu.memory_space<vmem>>, vector<16x256xf32>,
    return
  }
}

</mosaic_0001>

<llo_original>
// kernel: _lambda_.1
$region0: #{_lambda_.1}
  #allocation0 [shape = 'u32[]', space=smem, size = 0x4, offset = 0x4, fixed_abs, tag = 'smem constant byte address 0x4 - core index']
  #allocation1 [shape = 'u32[144,128]{1,0:T(1,128)}', space=vmem, size = 0x12000, scoped, tag = 'internal scratch']
  %s0 = inlined_call_operand.vmem [shape: f32[18,256], index: 0, kind: input, shape index: {}]
  %s1 = inlined_call_operand.vmem [shape: f32[16,256], index: 1, kind: output, shape index: {}]
  %s2 = sld [smem:[#allocation0]]
  $region14: #{_lambda_.1} parent=0
    _
  %s4 = ssub.s32 1, %s2
  %s5 = scalar_select 0, %s4, %s2
  // Predicated region
  $region2: #{_lambda_.1} parent=0 // pred_check
    _
  $region3: #{_lambda_.1} parent=0 // pred_check_branch
    %7 = sbr.rel (0) target = $region5
  $region4: #{_lambda_.1} parent=0 // pred_region
    _
  $region5: #{_lambda_.1} parent=0 // pred_fallthru
    _
  %v8 = vld [vmem:[%s0] sm:$0xff]
  %v9 = vld [vmem:[%s0 + $0x8] sm:$0xff]
  %v10 = vld [vmem:[%s0 + $0x10] sm:$0xff]
  %v11 = vld [vmem:[%s0 + $0x18] sm:$0xff]
  %v12 = vld [vmem:[%s0 + $0x20] sm:$0x3]
  %v13 = vld [vmem:[%s0 + $0x28] sm:$0x3]
  %v14 = vmul.f32 %v8, 2.0
  %v15 = vmul.f32 %v9, 2.0
  %v16 = vmul.f32 %v10, 2.0
  %v17 = vmul.f32 %v11, 2.0
  %v18 = vmul.f32 %v12, 2.0
  %v19 = vmul.f32 %v13, 2.0
  %vm26 = vcmask 1046528
  %v27 = vrot.slane %v14, 1
  %v28 = vrot.slane %v16, 1
  %v29 = vsel %vm26, %v27, %v28
  %v30 = vrot.slane %v15, 1
  %v31 = vrot.slane %v17, 1
  %v32 = vsel %vm26, %v30, %v31
  %v33 = vrot.slane %v18, 1
  %v34 = vsel %vm26, %v28, %v33
  %v35 = vrot.slane %v19, 1
  %v36 = vsel %vm26, %v31, %v35
  %v41 = vadd.f32 %v8, %v29
  %v42 = vadd.f32 %v9, %v32
  %v43 = vadd.f32 %v10, %v34
  %v44 = vadd.f32 %v11, %v36
  %vm51 = vcmask 1045504
  %v52 = vrot.slane %v8, 2
  %v53 = vrot.slane %v10, 2
  %v54 = vsel %vm51, %v52, %v53
  %v55 = vrot.slane %v9, 2
  %v56 = vrot.slane %v11, 2
  %v57 = vsel %vm51, %v55, %v56
  %v58 = vrot.slane %v12, 2
  %v59 = vsel %vm51, %v53, %v58
  %v60 = vrot.slane %v13, 2
  %v61 = vsel %vm51, %v56, %v60
  %v66 = vadd.f32 %v41, %v54
  %v67 = vadd.f32 %v42, %v57
  %v68 = vadd.f32 %v43, %v59
  %v69 = vadd.f32 %v44, %v61
  %vm70 = vcmask 1041408
  %v71 = vrot.slane %v8, 6
  %v72 = vrot.slane %v9, 6
  %v73 = vrot.slane %v10, 6
  %v74 = vsel %vm70, %v71, %v73
  %v75 = vrot.slane %v11, 6
  %v76 = vsel %vm70, %v72, %v75
  %v83 = vsub.f32 %v8, %v71
  %v84 = vsub.f32 %v9, %v72
  %v85 = vsub.f32 %v10, %v74
  %v86 = vsub.f32 %v11, %v76
  %v87 = vsub.f32 %v12, %v73
  %v88 = vsub.f32 %v13, %v75
  %89 = vrot.lane.b32.xlu0 %v66, 1
  %v90 = vpop.permute.xlu0 %89
  %91 = vrot.lane.b32.xlu0 %v68, 1
  %v92 = vpop.permute.xlu0 %91
  %93 = vrot.lane.b32.xlu0 %v67, 1
  %v94 = vpop.permute.xlu0 %93
  %95 = vrot.lane.b32.xlu0 %v69, 1
  %v96 = vpop.permute.xlu0 %95
  %v97 = vlaneseq
  %v98 = vand.u32 %v97, 127
  %vm99 = vcmp.lt.s32.totalorder %v98, 1
  %v100 = vsel %vm99, %v90, %v94
  %v101 = vsel %vm99, %v92, %v96
  %v102 = vsel %vm99, %v94, %v90
  %v103 = vsel %vm99, %v96, %v92
  %104 = vrot.lane.b32.xlu0 %v66, 127
  %v105 = vpop.permute.xlu0 %104
  %106 = vrot.lane.b32.xlu0 %v68, 127
  %v107 = vpop.permute.xlu0 %106
  %108 = vrot.lane.b32.xlu0 %v67, 127
  %v109 = vpop.permute.xlu0 %108
  %110 = vrot.lane.b32.xlu0 %v69, 127
  %v111 = vpop.permute.xlu0 %110
  %vm112 = vcmp.lt.s32.totalorder %v98, 127
  %v113 = vsel %vm112, %v105, %v109
  %v114 = vsel %vm112, %v107, %v111
  %v115 = vsel %vm112, %v109, %v105
  %v116 = vsel %vm112, %v111, %v107
  %v123 = vrot.slane %v83, 2
  %v124 = vrot.slane %v85, 2
  %v125 = vsel %vm51, %v123, %v124
  %v126 = vrot.slane %v84, 2
  %v127 = vrot.slane %v86, 2
  %v128 = vsel %vm51, %v126, %v127
  %v129 = vrot.slane %v87, 2
  %v130 = vsel %vm51, %v124, %v129
  %v131 = vrot.slane %v88, 2
  %v132 = vsel %vm51, %v127, %v131
  %137 = vrot.lane.b32.xlu0 %v125, 1
  %v138 = vpop.permute.xlu0 %137
  %139 = vrot.lane.b32.xlu0 %v130, 1
  %v140 = vpop.permute.xlu0 %139
  %141 = vrot.lane.b32.xlu0 %v128, 1
  %v142 = vpop.permute.xlu0 %141
  %143 = vrot.lane.b32.xlu0 %v132, 1
  %v144 = vpop.permute.xlu0 %143
  %v145 = vsel %vm99, %v138, %v142
  %v146 = vsel %vm99, %v140, %v144
  %v147 = vsel %vm99, %v142, %v138
  %v148 = vsel %vm99, %v144, %v140
  %149 = vrot.lane.b32.xlu0 %v125, 127
  %v150 = vpop.permute.xlu0 %149
  %151 = vrot.lane.b32.xlu0 %v130, 127
  %v152 = vpop.permute.xlu0 %151
  %153 = vrot.lane.b32.xlu0 %v128, 127
  %v154 = vpop.permute.xlu0 %153
  %155 = vrot.lane.b32.xlu0 %v132, 127
  %v156 = vpop.permute.xlu0 %155
  %v157 = vsel %vm112, %v150, %v154
  %v158 = vsel %vm112, %v152, %v156
  %v159 = vsel %vm112, %v154, %v150
  %v160 = vsel %vm112, %v156, %v152
  %v161 = vsub.f32 %v113, %v102
  %v162 = vsub.f32 %v115, %v100
  %v163 = vsub.f32 %v114, %v103
  %v164 = vsub.f32 %v116, %v101
  %v165 = vmul.f32 %v83, 2.0
  %v166 = vmul.f32 %v84, 2.0
  %v167 = vmul.f32 %v85, 2.0
  %v168 = vmul.f32 %v86, 2.0
  %v169 = vmul.f32 %v87, 2.0
  %v170 = vmul.f32 %v88, 2.0
  %v177 = vrot.slane %v165, 2
  %v178 = vrot.slane %v167, 2
  %v179 = vsel %vm51, %v177, %v178
  %v180 = vrot.slane %v166, 2
  %v181 = vrot.slane %v168, 2
  %v182 = vsel %vm51, %v180, %v181
  %v183 = vrot.slane %v169, 2
  %v184 = vsel %vm51, %v178, %v183
  %v185 = vrot.slane %v170, 2
  %v186 = vsel %vm51, %v181, %v185
  %v191 = vadd.f32 %v147, %v179
  %v192 = vadd.f32 %v145, %v182
  %v193 = vadd.f32 %v148, %v184
  %v194 = vadd.f32 %v146, %v186
  %v195 = vadd.f32 %v191, %v157
  %v196 = vadd.f32 %v192, %v159
  %v197 = vadd.f32 %v193, %v158
  %v198 = vadd.f32 %v194, %v160
  %v199 = vand.u32 2147483647, %v161
  %v200 = vand.u32 2147483647, %v162
  %v201 = vand.u32 2147483647, %v163
  %v202 = vand.u32 2147483647, %v164
  %v203 = vround.ne.pseudo %v199
  %v204 = vround.ne.pseudo %v200
  %v205 = vround.ne.pseudo %v201
  %v206 = vround.ne.pseudo %v202
  %v207 = vmax.f32 %v203, 0.0
  %v208 = vmax.f32 %v204, 0.0
  %v209 = vmax.f32 %v205, 0.0
  %v210 = vmax.f32 %v206, 0.0
  %v211 = vmin.f32 %v207, 255.0
  %v212 = vmin.f32 %v208, 255.0
  %v213 = vmin.f32 %v209, 255.0
  %v214 = vmin.f32 %v210, 255.0
  %v215 = vand.u32 2147483647, %v195
  %v216 = vand.u32 2147483647, %v196
  %v217 = vand.u32 2147483647, %v197
  %v218 = vand.u32 2147483647, %v198
  %v219 = vround.ne.pseudo %v215
  %v220 = vround.ne.pseudo %v216
  %v221 = vround.ne.pseudo %v217
  %v222 = vround.ne.pseudo %v218
  %v223 = vmax.f32 %v219, 0.0
  %v224 = vmax.f32 %v220, 0.0
  %v225 = vmax.f32 %v221, 0.0
  %v226 = vmax.f32 %v222, 0.0
  %v227 = vmin.f32 %v223, 255.0
  %v228 = vmin.f32 %v224, 255.0
  %v229 = vmin.f32 %v225, 255.0
  %v230 = vmin.f32 %v226, 255.0
  %v231 = vmul.f32 %v211, 0.5
  %v232 = vmul.f32 %v212, 0.5
  %v233 = vmul.f32 %v213, 0.5
  %v234 = vmul.f32 %v214, 0.5
  %v235 = vmul.f32 %v227, 0.5
  %v236 = vmul.f32 %v228, 0.5
  %v237 = vmul.f32 %v229, 0.5
  %v238 = vmul.f32 %v230, 0.5
  %v239 = vadd.f32 %v231, %v235
  %v240 = vadd.f32 %v232, %v236
  %v241 = vadd.f32 %v233, %v237
  %v242 = vadd.f32 %v234, %v238
  %v243 = vround.ne.pseudo %v239
  %v244 = vround.ne.pseudo %v240
  %v245 = vround.ne.pseudo %v241
  %v246 = vround.ne.pseudo %v242
  %v247 = vmax.f32 %v243, 0.0
  %v248 = vmax.f32 %v244, 0.0
  %v249 = vmax.f32 %v245, 0.0
  %v250 = vmax.f32 %v246, 0.0
  %v251 = vmin.f32 %v247, 255.0
  %v252 = vmin.f32 %v248, 255.0
  %v253 = vmin.f32 %v249, 255.0
  %v254 = vmin.f32 %v250, 255.0
  %v255 = vmul.f32 %v251, 0.003921569
  %v256 = vmul.f32 %v252, 0.003921569
  %v257 = vmul.f32 %v253, 0.003921569
  %v258 = vmul.f32 %v254, 0.003921569
  %259 = vst [vmem:[%s1] sm:$0xff] %v255
  %260 = vst [vmem:[%s1 + $0x8] sm:$0xff] %v256
  %261 = vst [vmem:[%s1 + $0x10] sm:$0xff] %v257
  %262 = vst [vmem:[%s1 + $0x18] sm:$0xff] %v258
  // Predicated region
  $region6: #{_lambda_.1} parent=0 // pred_check
    _
  $region7: #{_lambda_.1} parent=0 // pred_check_branch
    %264 = sbr.rel (0) target = $region9
  $region8: #{_lambda_.1} parent=0 // pred_region
    _
  $region9: #{_lambda_.1} parent=0 // pred_fallthru
    _
  // Predicated region
  $region10: #{_lambda_.1} parent=0 // pred_check
    _
  $region11: #{_lambda_.1} parent=0 // pred_check_branch
    %266 = sbr.rel (0) target = $region13
  $region12: #{_lambda_.1} parent=0 // pred_region
    _
  $region13: #{_lambda_.1} parent=0 // pred_fallthru
    _

</llo_original>
